<compile_context>
chip_gen: v6e
topology: v6e:2x2x1
jax: 0.10.0
libtpu: 0.0.40
codegen_flags: <defaults>
</compile_context>

<pallas_src>
import numpy as np
import jax
import jax.numpy as jnp
from jax import lax
from jax.experimental import pallas as pl
from jax.experimental.pallas import tpu as pltpu

# ---- problem sizes (small, consistent with the module) ----
B = 2          # batch
L = 8          # query sequence length
T = 8          # key/value sequence length
D = 32         # d_model
NH = 2         # n_head
DK = D         # d_k = d_model (per the GatedFusion __init__)
DV = D         # d_v = d_model
LN_EPS = 1e-5

BL = B * L
BT = B * T
OQ = 0
OK_ = NH * DK
OV = 2 * NH * DK
WPROJ = 2 * NH * DK + NH * DV          # packed projection width = 192
SLAB_W = 128                           # lane-dense merged output width
NEG_INF = -1e30                        # must stay -1e30: exp underflows to exactly 0


def mha_kernel(q_ref, k_ref, v_ref, wqkv_ref, wfc_ref, misc_ref, out_ref):
    xq = q_ref[...]                                             # (BL, D) f32 (residual)

    # Row-stack q|k|v (sublane-aligned 16-row chunks) and cast to bf16 for the MXU.
    x_bf = jnp.concatenate([xq, k_ref[...], v_ref[...]], axis=0).astype(jnp.bfloat16)

    # Fused Q/K/V projection: one lane-dense bf16 matmul (48,32)@(32,192), f32 acc.
    proj = (jnp.dot(x_bf, wqkv_ref[...], preferred_element_type=jnp.float32)
            + misc_ref[0:1, :])                                 # (48, 192) f32

    q = proj[0:BL, OQ:OQ + NH * DK].astype(jnp.bfloat16)        # (BL, NH*DK), pre-scaled
    k = proj[BL:BL + BT, OK_:OK_ + NH * DK].astype(jnp.bfloat16)
    v = proj[BL + BT:BL + 2 * BT, OV:OV + NH * DV].astype(jnp.bfloat16)

    # Block-diagonal batch mask (hoisted out of the head loop).
    ri = lax.broadcasted_iota(jnp.int32, (BL, BT), 0)
    ci = lax.broadcasted_iota(jnp.int32, (BL, BT), 1)
    same_batch = None
    for b in range(B):
        blk = ((ri >= b * L) & (ri < (b + 1) * L)) & ((ci >= b * T) & (ci < (b + 1) * T))
        same_batch = blk if same_batch is None else (same_batch | blk)

    # Contract last dims of q and k directly (no kh.T / XLU transpose).
    dn = (((1,), (1,)), ((), ()))

    o_heads = []
    p_heads = []
    for h in range(NH):
        qh = q[:, h * DK:(h + 1) * DK]                          # (BL, DK) bf16
        kh = k[:, h * DK:(h + 1) * DK]                          # (BT, DK) bf16
        vh = v[:, h * DV:(h + 1) * DV]                          # (BT, DV) bf16

        s = lax.dot_general(qh, kh, dn, preferred_element_type=jnp.float32)  # (BL, BT) f32
        s = jnp.where(same_batch, s, NEG_INF)
        m = jnp.max(s, axis=-1, keepdims=True)
        p = jnp.exp(s - m)                                      # off-block -> exactly 0.0
        p = p * pl.reciprocal(jnp.sum(p, axis=-1, keepdims=True), approx=True)
        p_heads.append(p)

        oh = jnp.dot(p.astype(jnp.bfloat16), vh, preferred_element_type=jnp.float32)
        o_heads.append(oh)                                      # (BL, DV) f32

    # Fused fc: lane-concat the head outputs -> one (16,64)@(64,32) matmul.
    o_cat = jnp.concatenate(o_heads, axis=1).astype(jnp.bfloat16)   # (BL, NH*DV)
    acc = jnp.dot(o_cat, wfc_ref[...], preferred_element_type=jnp.float32)  # (BL, D)

    # fc bias + residual + LayerNorm (biased variance, like nn.LayerNorm) — all f32.
    y = acc + misc_ref[1:2, 0:D] + xq
    mu = jnp.mean(y, axis=-1, keepdims=True)
    var = jnp.mean((y - mu) ** 2, axis=-1, keepdims=True)
    yn = (y - mu) * lax.rsqrt(var + LN_EPS)
    out_ln = yn * misc_ref[2:3, 0:D] + misc_ref[3:4, 0:D]       # (BL, D)

    # One lane-dense (16,128) slab: [out | p_h0 | p_h1 | zero pad] -> unmasked stores.
    pad = jnp.zeros((BL, SLAB_W - D - NH * BT), jnp.float32)
    out_ref[...] = jnp.concatenate([out_ln] + p_heads + [pad], axis=1)


def pack_params(params):
    """Fold the attention scale into w_q/b_q and pack everything into 3 slabs.

    Called ONCE outside the per-call jitted path (weights are static).
    Weight slabs are stored in bf16 (MXU inputs); biases / LN params stay f32.
    """
    wq, bq, wk, bk, wv, bv, wfc, bfc, ln_g, ln_b = params
    scale = np.float32(1.0 / np.sqrt(DK))
    w_qkv = jnp.concatenate([wq * scale, wk, wv], axis=1).astype(jnp.bfloat16)   # (D, 192)
    w_fc = wfc.astype(jnp.bfloat16)                                              # (64, 32)

    def row(vec):
        pad = jnp.zeros((WPROJ - vec.shape[0],), jnp.float32)
        return jnp.concatenate([vec, pad]).reshape(1, WPROJ)

    b_qkv = jnp.concatenate([bq * scale, bk, bv]).reshape(1, WPROJ)              # (1, 192)
    # Each small vector on its own sublane row starting at lane 0 (no lane offsets).
    misc = jnp.concatenate([b_qkv, row(bfc), row(ln_g), row(ln_b)], axis=0)      # (4, 192)
    return w_qkv, w_fc, misc


def mha_forward(q, k, v, w_qkv, w_fc, misc):
    slab = pl.pallas_call(
        mha_kernel,
        out_shape=jax.ShapeDtypeStruct((BL, SLAB_W), jnp.float32),
        in_specs=[pl.BlockSpec(memory_space=pltpu.MemorySpace.VMEM)] * 6,
        out_specs=pl.BlockSpec(memory_space=pltpu.MemorySpace.VMEM),
    )(q.reshape(BL, D), k.reshape(BT, D), v.reshape(BT, D), w_qkv, w_fc, misc)

    out = slab[:, 0:D].reshape(B, L, D)
    # Per-head stacked attention (NH, BL, BT); the per-batch diagonal blocks are
    # extracted here with plain XLA slicing (layout plumbing outside the kernel).
    p_all = jnp.stack([slab[:, D + h * BT:D + (h + 1) * BT] for h in range(NH)], axis=0)
    attn = jnp.stack(
        [p_all[:, b * L:(b + 1) * L, b * T:(b + 1) * T] for b in range(B)], axis=1)
    return out, attn                                            # (B,L,D), (NH,B,L,T)


mha_forward_jit = jax.jit(mha_forward)


def make_params(key):
    ks = jax.random.split(key, 8)
    std_qk = np.float32(np.sqrt(2.0 / (D + DK)))
    std_v = np.float32(np.sqrt(2.0 / (D + DV)))
    wq = jax.random.normal(ks[0], (D, NH * DK), jnp.float32) * std_qk
    wk = jax.random.normal(ks[1], (D, NH * DK), jnp.float32) * std_qk
    wv = jax.random.normal(ks[2], (D, NH * DV), jnp.float32) * std_v
    wfc = jax.random.normal(ks[3], (NH * DV, D), jnp.float32) * np.float32(
        np.sqrt(2.0 / (NH * DV + D)))
    bq = jax.random.normal(ks[4], (NH * DK,), jnp.float32) * 0.05
    bk = jax.random.normal(ks[5], (NH * DK,), jnp.float32) * 0.05
    bv = jax.random.normal(ks[6], (NH * DV,), jnp.float32) * 0.05
    bfc = jax.random.normal(ks[7], (D,), jnp.float32) * 0.05
    ln_g = jnp.ones((D,), jnp.float32)
    ln_b = jnp.zeros((D,), jnp.float32)
    return (wq, bq, wk, bk, wv, bv, wfc, bfc, ln_g, ln_b)


def reference(q_in, k_in, v_in, params):
    """Pure-JAX (f32) transcription of the PyTorch MultiHeadAttention.forward."""
    wq, bq, wk, bk, wv, bv, wfc, bfc, ln_g, ln_b = params
    q = q_in @ wq + bq                                # (B, L, NH*DK)
    k = k_in @ wk + bk                                # (B, T, NH*DK)
    v = v_in @ wv + bv                                # (B, T, NH*DV)
    q = q.reshape(B, L, NH, DK).transpose(2, 0, 1, 3)   # (H, B, L, DK)
    k = k.reshape(B, T, NH, DK).transpose(2, 0, 1, 3)
    v = v.reshape(B, T, NH, DV).transpose(2, 0, 1, 3)
    attn = jnp.einsum('hblk,hbtk->hblt', q, k) / np.float32(np.sqrt(DK))
    attn = jax.nn.softmax(attn, axis=3)
    o = jnp.einsum('hblt,hbtv->hblv', attn, v)           # (H, B, L, DV)
    o = o.transpose(1, 2, 0, 3).reshape(B, L, NH * DV)
    o = o @ wfc + bfc                                    # dropout = identity (eval)
    x = o + q_in                                         # residual = query input
    mu = x.mean(-1, keepdims=True)
    var = ((x - mu) ** 2).mean(-1, keepdims=True)
    out = (x - mu) / jnp.sqrt(var + LN_EPS) * ln_g + ln_b
    return out, attn


if __name__ == "__main__":
    key = jax.random.PRNGKey(0)
    kq, kk, kv, kp = jax.random.split(key, 4)
    q_in = jax.random.normal(kq, (B, L, D), jnp.float32)
    k_in = jax.random.normal(kk, (B, T, D), jnp.float32)
    v_in = jax.random.normal(kv, (B, T, D), jnp.float32)
    params = make_params(kp)

    # Pack the static weights ONCE, outside the per-call jitted path.
    w_qkv, w_fc, misc = pack_params(params)

    out, attn = mha_forward_jit(q_in, k_in, v_in, w_qkv, w_fc, misc)
    jax.block_until_ready((out, attn))

    ref_out, ref_attn = reference(q_in, k_in, v_in, params)
    # Tolerances relaxed vs. the pure-f32 version: the kernel feeds the MXU
    # bf16 inputs and uses the approximate EUP reciprocal for the softmax
    # denominator (softmax / LayerNorm math itself stays in f32).
    np.testing.assert_allclose(np.asarray(out), np.asarray(ref_out), rtol=2e-2, atol=2e-2)
    np.testing.assert_allclose(np.asarray(attn), np.asarray(ref_attn), rtol=1e-2, atol=1e-2)
    print("KERNEL_OK")
</pallas_src>

<mosaic_0001>
module attributes {stable_mosaic.version = 11 : i64} {
  func.func @mha_kernel(%arg0: memref<16x32xf32, #tpu.memory_space<vmem>>, %arg1: memref<16x32xf32, #tpu.memory_space<vmem>>, %arg2: memref<16x32xf32, #tpu.memory_space<vmem>>, %arg3: memref<32x192xbf16, #tpu.memory_space<vmem>>, %arg4: memref<64x32xbf16, #tpu.memory_space<vmem>>, %arg5: memref<4x192xf32, #tpu.memory_space<vmem>>, %arg6: memref<16x128xf32, #tpu.memory_space<vmem>>) attributes {dimension_semantics = [], scalar_prefetch = 0 : i64, scratch_operands = 0 : i64, tpu.core_type = #tpu.core_type<tc>} {
    %c0 = arith.constant 0 : index
    %c0_0 = arith.constant 0 : index
    %0 = vector.load %arg0[%c0, %c0_0] : memref<16x32xf32, #tpu.memory_space<vmem>>, vector<16x32xf32>
    %c0_1 = arith.constant 0 : index
    %c0_2 = arith.constant 0 : index
    %1 = vector.load %arg1[%c0_1, %c0_2] : memref<16x32xf32, #tpu.memory_space<vmem>>, vector<16x32xf32>
    %c0_3 = arith.constant 0 : index
    %c0_4 = arith.constant 0 : index
    %2 = vector.load %arg2[%c0_3, %c0_4] : memref<16x32xf32, #tpu.memory_space<vmem>>, vector<16x32xf32>
    %3 = tpu.concatenate %0, %1, %2 in 0 : vector<16x32xf32>, vector<16x32xf32>, vector<16x32xf32> -> vector<48x32xf32>
    %4 = arith.truncf %3 : vector<48x32xf32> to vector<48x32xbf16>
    %c0_5 = arith.constant 0 : index
    %c0_6 = arith.constant 0 : index
    %5 = vector.load %arg3[%c0_5, %c0_6] : memref<32x192xbf16, #tpu.memory_space<vmem>>, vector<32x192xbf16>
    %cst = arith.constant dense<0.000000e+00> : vector<48x192xf32>
    %6 = tpu.matmul %4, %5, %cst {dimension_numbers = #tpu.dot_dimension_numbers<[1], [0], [0], [1], [0, 0, 1, 1], [], []>} : vector<48x32xbf16>, vector<32x192xbf16>, vector<48x192xf32> -> vector<48x192xf32>
    %c0_7 = arith.constant 0 : index
    %c0_8 = arith.constant 0 : index
    %7 = vector.load %arg5[%c0_7, %c0_8] : memref<4x192xf32, #tpu.memory_space<vmem>>, vector<1x192xf32>
    %8 = vector.broadcast %7 : vector<1x192xf32> to vector<48x192xf32>
    %9 = arith.addf %6, %8 : vector<48x192xf32>
    %10 = vector.extract_strided_slice %9 {offsets = [0, 0], sizes = [16, 64], strides = [1, 1]} : vector<48x192xf32> to vector<16x64xf32>
    %11 = arith.truncf %10 : vector<16x64xf32> to vector<16x64xbf16>
    %12 = vector.extract_strided_slice %9 {offsets = [16, 64], sizes = [16, 64], strides = [1, 1]} : vector<48x192xf32> to vector<16x64xf32>
    %13 = arith.truncf %12 : vector<16x64xf32> to vector<16x64xbf16>
    %14 = vector.extract_strided_slice %9 {offsets = [32, 128], sizes = [16, 64], strides = [1, 1]} : vector<48x192xf32> to vector<16x64xf32>
    %15 = arith.truncf %14 : vector<16x64xf32> to vector<16x64xbf16>
    %16 = tpu.iota {dimensions = array<i32: 0>} : vector<16x16xi32>
    %17 = tpu.iota {dimensions = array<i32: 1>} : vector<16x16xi32>
    %c0_i32 = arith.constant 0 : i32
    %18 = vector.broadcast %c0_i32 : i32 to vector<16x16xi32>
    %19 = arith.cmpi sge, %16, %18 : vector<16x16xi32>
    %c8_i32 = arith.constant 8 : i32
    %20 = vector.broadcast %c8_i32 : i32 to vector<16x16xi32>
    %21 = arith.cmpi slt, %16, %20 : vector<16x16xi32>
    %22 = arith.andi %19, %21 : vector<16x16xi1>
    %c0_i32_9 = arith.constant 0 : i32
    %23 = vector.broadcast %c0_i32_9 : i32 to vector<16x16xi32>
    %24 = arith.cmpi sge, %17, %23 : vector<16x16xi32>
    %c8_i32_10 = arith.constant 8 : i32
    %25 = vector.broadcast %c8_i32_10 : i32 to vector<16x16xi32>
    %26 = arith.cmpi slt, %17, %25 : vector<16x16xi32>
    %27 = arith.andi %24, %26 : vector<16x16xi1>
    %28 = arith.andi %22, %27 : vector<16x16xi1>
    %c8_i32_11 = arith.constant 8 : i32
    %29 = vector.broadcast %c8_i32_11 : i32 to vector<16x16xi32>
    %30 = arith.cmpi sge, %16, %29 : vector<16x16xi32>
    %c16_i32 = arith.constant 16 : i32
    %31 = vector.broadcast %c16_i32 : i32 to vector<16x16xi32>
    %32 = arith.cmpi slt, %16, %31 : vector<16x16xi32>
    %33 = arith.andi %30, %32 : vector<16x16xi1>
    %c8_i32_12 = arith.constant 8 : i32
    %34 = vector.broadcast %c8_i32_12 : i32 to vector<16x16xi32>
    %35 = arith.cmpi sge, %17, %34 : vector<16x16xi32>
    %c16_i32_13 = arith.constant 16 : i32
    %36 = vector.broadcast %c16_i32_13 : i32 to vector<16x16xi32>
    %37 = arith.cmpi slt, %17, %36 : vector<16x16xi32>
    %38 = arith.andi %35, %37 : vector<16x16xi1>
    %39 = arith.andi %33, %38 : vector<16x16xi1>
    %40 = arith.ori %28, %39 : vector<16x16xi1>
    %41 = vector.extract_strided_slice %11 {offsets = [0, 0], sizes = [16, 32], strides = [1, 1]} : vector<16x64xbf16> to vector<16x32xbf16>
    %42 = vector.extract_strided_slice %13 {offsets = [0, 0], sizes = [16, 32], strides = [1, 1]} : vector<16x64xbf16> to vector<16x32xbf16>
    %43 = vector.extract_strided_slice %15 {offsets = [0, 0], sizes = [16, 32], strides = [1, 1]} : vector<16x64xbf16> to vector<16x32xbf16>
    %cst_14 = arith.constant dense<0.000000e+00> : vector<16x16xf32>
    %44 = tpu.matmul %41, %42, %cst_14 {dimension_numbers = #tpu.dot_dimension_numbers<[1], [1], [0], [0], [0, 0, 1, 0], [], []>} : vector<16x32xbf16>, vector<16x32xbf16>, vector<16x16xf32> -> vector<16x16xf32>
    %cst_15 = arith.constant -1.000000e+30 : f32
    %45 = vector.broadcast %cst_15 : f32 to vector<16x16xf32>
    %46 = arith.select %40, %44, %45 : vector<16x16xi1>, vector<16x16xf32>
    %cst_16 = arith.constant dense<0xFF800000> : vector<16xf32>
    %47 = vector.multi_reduction <maximumf>, %46, %cst_16 [1] : vector<16x16xf32> to vector<16xf32>
    %48 = vector.shape_cast %47 : vector<16xf32> to vector<16x1xf32>
    %49 = vector.broadcast %48 : vector<16x1xf32> to vector<16x16xf32>
    %50 = arith.subf %46, %49 : vector<16x16xf32>
    %51 = math.exp %50 : vector<16x16xf32>
    %cst_17 = arith.constant dense<0.000000e+00> : vector<16xf32>
    %52 = vector.multi_reduction <add>, %51, %cst_17 [1] : vector<16x16xf32> to vector<16xf32>
    %53 = vector.shape_cast %52 : vector<16xf32> to vector<16x1xf32>
    %54 = tpu.reciprocal %53 {approx = true} : vector<16x1xf32> -> vector<16x1xf32>
    %55 = vector.broadcast %54 : vector<16x1xf32> to vector<16x16xf32>
    %56 = arith.mulf %51, %55 : vector<16x16xf32>
    %57 = arith.truncf %56 : vector<16x16xf32> to vector<16x16xbf16>
    %cst_18 = arith.constant dense<0.000000e+00> : vector<16x32xf32>
    %58 = tpu.matmul %57, %43, %cst_18 {dimension_numbers = #tpu.dot_dimension_numbers<[1], [0], [0], [1], [0, 0, 1, 1], [], []>} : vector<16x16xbf16>, vector<16x32xbf16>, vector<16x32xf32> -> vector<16x32xf32>
    %59 = vector.extract_strided_slice %11 {offsets = [0, 32], sizes = [16, 32], strides = [1, 1]} : vector<16x64xbf16> to vector<16x32xbf16>
    %60 = vector.extract_strided_slice %13 {offsets = [0, 32], sizes = [16, 32], strides = [1, 1]} : vector<16x64xbf16> to vector<16x32xbf16>
    %61 = vector.extract_strided_slice %15 {offsets = [0, 32], sizes = [16, 32], strides = [1, 1]} : vector<16x64xbf16> to vector<16x32xbf16>
    %cst_19 = arith.constant dense<0.000000e+00> : vector<16x16xf32>
    %62 = tpu.matmul %59, %60, %cst_19 {dimension_numbers = #tpu.dot_dimension_numbers<[1], [1], [0], [0], [0, 0, 1, 0], [], []>} : vector<16x32xbf16>, vector<16x32xbf16>, vector<16x16xf32> -> vector<16x16xf32>
    %cst_20 = arith.constant -1.000000e+30 : f32
    %63 = vector.broadcast %cst_20 : f32 to vector<16x16xf32>
    %64 = arith.select %40, %62, %63 : vector<16x16xi1>, vector<16x16xf32>
    %cst_21 = arith.constant dense<0xFF800000> : vector<16xf32>
    %65 = vector.multi_reduction <maximumf>, %64, %cst_21 [1] : vector<16x16xf32> to vector<16xf32>
    %66 = vector.shape_cast %65 : vector<16xf32> to vector<16x1xf32>
    %67 = vector.broadcast %66 : vector<16x1xf32> to vector<16x16xf32>
    %68 = arith.subf %64, %67 : vector<16x16xf32>
    %69 = math.exp %68 : vector<16x16xf32>
    %cst_22 = arith.constant dense<0.000000e+00> : vector<16xf32>
    %70 = vector.multi_reduction <add>, %69, %cst_22 [1] : vector<16x16xf32> to vector<16xf32>
    %71 = vector.shape_cast %70 : vector<16xf32> to vector<16x1xf32>
    %72 = tpu.reciprocal %71 {approx = true} : vector<16x1xf32> -> vector<16x1xf32>
    %73 = vector.broadcast %72 : vector<16x1xf32> to vector<16x16xf32>
    %74 = arith.mulf %69, %73 : vector<16x16xf32>
    %75 = arith.truncf %74 : vector<16x16xf32> to vector<16x16xbf16>
    %cst_23 = arith.constant dense<0.000000e+00> : vector<16x32xf32>
    %76 = tpu.matmul %75, %61, %cst_23 {dimension_numbers = #tpu.dot_dimension_numbers<[1], [0], [0], [1], [0, 0, 1, 1], [], []>} : vector<16x16xbf16>, vector<16x32xbf16>, vector<16x32xf32> -> vector<16x32xf32>
    %77 = tpu.concatenate %58, %76 in 1 : vector<16x32xf32>, vector<16x32xf32> -> vector<16x64xf32>
    %78 = arith.truncf %77 : vector<16x64xf32> to vector<16x64xbf16>
    %c0_24 = arith.constant 0 : index
    %c0_25 = arith.constant 0 : index
    %79 = vector.load %arg4[%c0_24, %c0_25] : memref<64x32xbf16, #tpu.memory_space<vmem>>, vector<64x32xbf16>
    %cst_26 = arith.constant dense<0.000000e+00> : vector<16x32xf32>
    %80 = tpu.matmul %78, %79, %cst_26 {dimension_numbers = #tpu.dot_dimension_numbers<[1], [0], [0], [1], [0, 0, 1, 1], [], []>} : vector<16x64xbf16>, vector<64x32xbf16>, vector<16x32xf32> -> vector<16x32xf32>
    %c1 = arith.constant 1 : index
    %c0_27 = arith.constant 0 : index
    %81 = vector.load %arg5[%c1, %c0_27] : memref<4x192xf32, #tpu.memory_space<vmem>>, vector<1x32xf32>
    %82 = vector.broadcast %81 : vector<1x32xf32> to vector<16x32xf32>
    %83 = arith.addf %80, %82 : vector<16x32xf32>
    %84 = arith.addf %83, %0 : vector<16x32xf32>
    %cst_28 = arith.constant dense<0.000000e+00> : vector<16xf32>
    %85 = vector.multi_reduction <add>, %84, %cst_28 [1] : vector<16x32xf32> to vector<16xf32>
    %86 = vector.shape_cast %85 : vector<16xf32> to vector<16x1xf32>
    %cst_29 = arith.constant 3.200000e+01 : f32
    %87 = vector.broadcast %cst_29 : f32 to vector<16x1xf32>
    %88 = arith.divf %86, %87 : vector<16x1xf32>
    %89 = vector.broadcast %88 : vector<16x1xf32> to vector<16x32xf32>
    %90 = arith.subf %84, %89 : vector<16x32xf32>
    %91 = arith.mulf %90, %90 : vector<16x32xf32>
    %cst_30 = arith.constant dense<0.000000e+00> : vector<16xf32>
    %92 = vector.multi_reduction <add>, %91, %cst_30 [1] : vector<16x32xf32> to vector<16xf32>
    %93 = vector.shape_cast %92 : vector<16xf32> to vector<16x1xf32>
    %cst_31 = arith.constant 3.200000e+01 : f32
    %94 = vector.broadcast %cst_31 : f32 to vector<16x1xf32>
    %95 = arith.divf %93, %94 : vector<16x1xf32>
    %96 = vector.broadcast %88 : vector<16x1xf32> to vector<16x32xf32>
    %97 = arith.subf %84, %96 : vector<16x32xf32>
    %cst_32 = arith.constant 9.99999974E-6 : f32
    %98 = vector.broadcast %cst_32 : f32 to vector<16x1xf32>
    %99 = arith.addf %95, %98 : vector<16x1xf32>
    %100 = math.rsqrt %99 : vector<16x1xf32>
    %101 = vector.broadcast %100 : vector<16x1xf32> to vector<16x32xf32>
    %102 = arith.mulf %97, %101 : vector<16x32xf32>
    %c2 = arith.constant 2 : index
    %c0_33 = arith.constant 0 : index
    %103 = vector.load %arg5[%c2, %c0_33] : memref<4x192xf32, #tpu.memory_space<vmem>>, vector<1x32xf32>
    %104 = vector.broadcast %103 : vector<1x32xf32> to vector<16x32xf32>
    %105 = arith.mulf %102, %104 : vector<16x32xf32>
    %c3 = arith.constant 3 : index
    %c0_34 = arith.constant 0 : index
    %106 = vector.load %arg5[%c3, %c0_34] : memref<4x192xf32, #tpu.memory_space<vmem>>, vector<1x32xf32>
    %107 = vector.broadcast %106 : vector<1x32xf32> to vector<16x32xf32>
    %108 = arith.addf %105, %107 : vector<16x32xf32>
    %cst_35 = arith.constant 0.000000e+00 : f32
    %109 = vector.broadcast %cst_35 : f32 to vector<16x64xf32>
    %110 = tpu.concatenate %108, %56, %74, %109 in 1 : vector<16x32xf32>, vector<16x16xf32>, vector<16x16xf32>, vector<16x64xf32> -> vector<16x128xf32>
    %c0_36 = arith.constant 0 : index
    %c0_37 = arith.constant 0 : index
    %111 = vector.load %arg6[%c0_36, %c0_37] : memref<16x128xf32, #tpu.memory_space<vmem>>, vector<16x128xf32>
    tpu.vector_store %arg6[%c0_36, %c0_37], %110 {strides = array<i32>} : memref<16x128xf32, #tpu.memory_space<vmem>>, vector<16x128xf32>,
    return
  }
}

</mosaic_0001>

<llo_original>
// kernel: mha_forward.1
$region0: #{mha_forward.1}
  #allocation0 [shape = 'u32[]', space=smem, size = 0x4, offset = 0x4, fixed_abs, tag = 'smem constant byte address 0x4 - core index']
  #allocation1 [shape = 'u32[144,128]{1,0:T(1,128)}', space=vmem, size = 0x12000, scoped, tag = 'internal scratch']
  %s0 = inlined_call_operand.vmem [shape: f32[16,32], index: 0, kind: input, shape index: {}]
  %s1 = inlined_call_operand.hbm [shape: f32[16,32], index: 1, kind: input, shape index: {}]
  %s2 = inlined_call_operand.hbm [shape: f32[16,32], index: 2, kind: input, shape index: {}]
  %s3 = inlined_call_operand.vmem [shape: bf16[32,192], index: 3, kind: input, shape index: {}]
  %s4 = inlined_call_operand.vmem [shape: bf16[64,32], index: 4, kind: input, shape index: {}]
  %s5 = inlined_call_operand.vmem [shape: f32[4,192], index: 5, kind: input, shape index: {}]
  %s6 = inlined_call_operand.vmem [shape: f32[16,128], index: 6, kind: output, shape index: {}]
  %s7 = sld [smem:[#allocation0]]
  $region42: #{mha_forward.1} parent=0
    _
  %s9 = ssub.s32 1, %s7
  %s10 = scalar_select 0, %s9, %s7
  $region1: #{mha_forward.1} parent=0
    #allocation2 [shape = 'u8[8192]{0}', space=vmem, size = 0x2000, scoped, tag = 'input window, operand 1, single buffered']
    #allocation3 [shape = 's32[1]{0}', space=sflag, size = 0x4, scoped, tag = 'scoped memory for mha_forward.1']
    #allocation4 [shape = 'u8[8192]{0}', space=vmem, size = 0x2000, scoped, tag = 'input window, operand 2, single buffered']
    #allocation5 [shape = 's32[1]{0}', space=sflag, size = 0x4, scoped, tag = 'scoped memory for mha_forward.1']
    %11 = vsyncpa [#allocation3], 0
    %12 = vsyncpa [#allocation5], 0
    // Predicated region
    $region2: #{mha_forward.1} parent=1 // pred_check
      _
    $region3: #{mha_forward.1} parent=1 // pred_check_branch
      %14 = sbr.rel (0) target = $region5
    $region4: #{mha_forward.1} parent=1 // pred_region
      _
    $region5: #{mha_forward.1} parent=1 // pred_fallthru
      _
    // Predicated region
    $region6: #{mha_forward.1} parent=1 // pred_check
      _
    $region7: #{mha_forward.1} parent=1 // pred_check_branch
      %16 = sbr.rel (0) target = $region9
    $region8: #{mha_forward.1} parent=1 // pred_region
      %s18 = ssub.s32 256, 256
      %19 = vsyncadd [#allocation3], %s18
      %s20 = sshll.u32 [#allocation2], 4
      %s21 = int_to_ptr.vmem [resolvable:$true] %s20
      %26 = dma.hbm_to_vmem [thread:$0]  %s1, 256, %s21, [#allocation3], 128, 128, 8
    $region9: #{mha_forward.1} parent=1 // pred_fallthru
      _
    // Predicated region
    $region10: #{mha_forward.1} parent=1 // pred_check
      _
    $region11: #{mha_forward.1} parent=1 // pred_check_branch
      %28 = sbr.rel (0) target = $region13
    $region12: #{mha_forward.1} parent=1 // pred_region
      %s30 = ssub.s32 256, 256
      %31 = vsyncadd [#allocation5], %s30
      %s32 = sshll.u32 [#allocation4], 4
      %s33 = int_to_ptr.vmem [resolvable:$true] %s32
      %38 = dma.hbm_to_vmem [thread:$0]  %s2, 256, %s33, [#allocation5], 128, 128, 8
    $region13: #{mha_forward.1} parent=1 // pred_fallthru
      _
    // Predicated region
    $region14: #{mha_forward.1} parent=1 // pred_check
      _
    $region15: #{mha_forward.1} parent=1 // pred_check_branch
      %40 = sbr.rel (0) target = $region17
    $region16: #{mha_forward.1} parent=1 // pred_region
      _
    $region17: #{mha_forward.1} parent=1 // pred_fallthru
      _
    // Predicated region
    $region18: #{mha_forward.1} parent=1 // pred_check
      _
    $region19: #{mha_forward.1} parent=1 // pred_check_branch
      %42 = sbr.rel (0) target = $region21
    $region20: #{mha_forward.1} parent=1 // pred_region
      _
    $region21: #{mha_forward.1} parent=1 // pred_fallthru
      _
    // Predicated region
    $region22: #{mha_forward.1} parent=1 // pred_check
      _
    $region23: #{mha_forward.1} parent=1 // pred_check_branch
      %44 = sbr.rel (0) target = $region25
    $region24: #{mha_forward.1} parent=1 // pred_region
      _
    $region25: #{mha_forward.1} parent=1 // pred_fallthru
      _
    // Predicated region
    $region26: #{mha_forward.1} parent=1 // pred_check
      _
    $region27: #{mha_forward.1} parent=1 // pred_check_branch
      %46 = sbr.rel (0) target = $region29
    $region28: #{mha_forward.1} parent=1 // pred_region
      %47 = dma.done [#allocation3], 256
    $region29: #{mha_forward.1} parent=1 // pred_fallthru
      _
    // Predicated region
    $region30: #{mha_forward.1} parent=1 // pred_check
      _
    $region31: #{mha_forward.1} parent=1 // pred_check_branch
      %49 = sbr.rel (0) target = $region33
    $region32: #{mha_forward.1} parent=1 // pred_region
      %50 = dma.done [#allocation5], 256
    $region33: #{mha_forward.1} parent=1 // pred_fallthru
      _
    %v52 = vld [vmem:[%s0] sm:$0xff]
    %v53 = vld [vmem:[%s0 + $0x8] sm:$0xff]
    %v54 = vld [vmem:[#allocation2] sm:$0xff]
    %v55 = vld [vmem:[#allocation2 + $0x8] sm:$0xff]
    %v56 = vld [vmem:[#allocation4] sm:$0xff]
    %v57 = vld [vmem:[#allocation4 + $0x8] sm:$0xff]
    %v58 = vpack.c.bf16 %v53, %v52
    %v59 = vpack.c.bf16 %v55, %v54
    %v60 = vpack.c.bf16 %v57, %v56
    %v61 = vld [vmem:[%s3] sm:$0xff]
    %v62 = vld [vmem:[%s3 + $0x8] sm:$0xff]
    %v63 = vld [vmem:[%s3 + $0x10] sm:$0xff]
    %v64 = vld [vmem:[%s3 + $0x18] sm:$0xff]
    %v65 = vld [vmem:[%s5] ss:$4 sm:$0x3]
    %v67 = vlaneseq
    %v68 = vshrl.u32 %v67, 7
    %v69 = vsub.s32 0, %v68
    %v70 = vrot.slane %v65, %v69
    %v71 = vlaneseq
    %v72 = vshrl.u32 %v71, 7
    %v73 = vsub.s32 1, %v72
    %v74 = vrot.slane %v65, %v73
    %v81 = vunpack.c.l.b16 %v61
    %v82 = vunpack.c.h.b16 %v61
    %v83 = vunpack.c.l.b16 %v62
    %v84 = vunpack.c.h.b16 %v62
    %v85 = vunpack.c.l.b16 %v63
    %v86 = vunpack.c.h.b16 %v63
    %v87 = vunpack.c.l.b16 %v64
    %v88 = vunpack.c.h.b16 %v64
    %v89 = vpack.c.b16 %v83, %v81
    %v90 = vpack.c.b16 %v84, %v82
    %v91 = vpack.c.b16 %v87, %v85
    %v92 = vpack.c.b16 %v88, %v86
    %vm97 = vcmask 261120
    %v99 = vsel %vm97, %v58, 0
    %v102 = vsel %vm97, %v59, 0
    %v105 = vsel %vm97, %v60, 0
    %107 = vmatprep.subr.bf16.mxu0 0
    %108 = vmatpush1.bf16.msra.mxu0 0
    %109 = vmatprep.subr.bf16.mxu0 0
    %110 = vmatpush1.bf16.msra.mxu0 0
    %111 = vmatprep.subr.bf16.mxu0 0
    %112 = vmatpush1.bf16.msra.mxu0 0
    %113 = vmatprep.subr.bf16.mxu0 0
    %114 = vmatpush1.bf16.msra.mxu0 0
    %115 = vmatprep.subr.bf16.mxu0 0
    %116 = vmatpush1.bf16.msra.mxu0 0
    %117 = vmatprep.subr.bf16.mxu0 0
    %118 = vmatpush1.bf16.msra.mxu0 0
    %119 = vmatprep.subr.bf16.mxu0 %v92
    %120 = vmatpush1.bf16.msra.mxu0 %v91
    %121 = vmatprep.subr.bf16.mxu0 %v90
    %122 = vmatpush1.bf16.msra.mxu0 %v89
    %123 = vmatprep.subr.bf16.mxu0 0
    %124 = vmatpush2.bf16.msra.mxu0 0
    %125 = vmatprep.subr.bf16.mxu0 0
    %126 = vmatpush2.bf16.msra.mxu0 0
    %127 = vmatprep.subr.bf16.mxu0 0
    %128 = vmatpush2.bf16.msra.mxu0 0
    %129 = vmatprep.subr.bf16.mxu0 0
    %130 = vmatpush2.bf16.msra.mxu0 0
    %131 = vmatprep.subr.bf16.mxu0 0
    %132 = vmatpush2.bf16.msra.mxu0 0
    %133 = vmatprep.subr.bf16.mxu0 0
    %134 = vmatpush2.bf16.msra.mxu0 0
    %135 = vmatprep.subr.bf16.mxu0 0
    %136 = vmatpush2.bf16.msra.mxu0 0
    %137 = vmatprep.subr.bf16.mxu0 0
    %138 = vmatpush2.bf16.msra.mxu0 0
    %139 = vmatprep.mubr.bf16.mxu0 0
    %140 = vmatmul.mubr.bf16.gmra.mxu0 %v99
    %v141 = vpop.f32.mrf.mxu0
    %v142 = vadd.f32 %v70, %v141
    %v143 = vpop.f32.mrf.mxu0
    %v144 = vpop.f32.mrf.mxu0
    %v145 = vadd.f32 %v70, %v144
    %v146 = vpop.f32.mrf.mxu0
    %147 = vmatprep.mubr.bf16.mxu0 0
    %148 = vmatmul.mubr.bf16.gmra.mxu0 %v102
    %v149 = vpop.f32.mrf.mxu0
    %v150 = vadd.f32 %v70, %v149
    %v151 = vpop.f32.mrf.mxu0
    %v152 = vpop.f32.mrf.mxu0
    %v153 = vadd.f32 %v70, %v152
    %v154 = vpop.f32.mrf.mxu0
    %155 = vmatprep.mubr.bf16.mxu0 0
    %156 = vmatmul.mubr.bf16.gmra.mxu0 %v105
    %v157 = vpop.f32.mrf.mxu0
    %v158 = vpop.f32.mrf.mxu0
    %v159 = vadd.f32 %v74, %v158
    %v160 = vpop.f32.mrf.mxu0
    %v161 = vpop.f32.mrf.mxu0
    %v162 = vadd.f32 %v74, %v161
    %163 = vdwg.mxu0
    %v164 = vpack.c.bf16 %v145, %v142
    %v165 = vpack.c.bf16 %v153, %v150
    %v166 = vpack.c.bf16 %v162, %v159
    %v167 = vlaneseq
    %v168 = vshrl.u32 %v167, 7
    %v169 = vadd.s32 %v168, 8
    %v170 = vlaneseq
    %v171 = vand.u32 %v170, 127
    %vm172 = vcmp.ge.s32.totalorder %v168, 0
    %vm173 = vcmp.ge.s32.totalorder %v169, 0
    %vm174 = vcmp.lt.s32.totalorder %v168, 8
    %vm175 = vcmp.lt.s32.totalorder %v169, 8
    %vm176 = vmand %vm172, %vm174
    %vm177 = vmand %vm173, %vm175
    %vm178 = vcmp.ge.s32.totalorder %v171, 0
    %vm179 = vcmp.lt.s32.totalorder %v171, 8
    %vm180 = vmand %vm178, %vm179
    %vm181 = vmand %vm176, %vm180
    %vm182 = vmand %vm177, %vm180
    %vm183 = vcmp.ge.s32.totalorder %v168, 8
    %vm184 = vcmp.ge.s32.totalorder %v169, 8
    %vm185 = vcmp.lt.s32.totalorder %v168, 16
    %vm186 = vcmp.lt.s32.totalorder %v169, 16
    %vm187 = vmand %vm183, %vm185
    %vm188 = vmand %vm184, %vm186
    %vm189 = vcmp.ge.s32.totalorder %v171, 8
    %vm190 = vcmp.lt.s32.totalorder %v171, 16
    %vm191 = vmand %vm189, %vm190
    %vm192 = vmand %vm187, %vm191
    %vm193 = vmand %vm188, %vm191
    %vm194 = vmor %vm181, %vm192
    %vm195 = vmor %vm182, %vm193
    %197 = vrot.lane.b32.xlu0 %v165, 64
    %v198 = vpop.permute.xlu0 %197
    %v200 = vsel %vm97, %v164, 0
    %v203 = vsel %vm97, %v198, 0
    %205 = vmatprep.subr.bf16.mxu0 0
    %206 = vmatpush1.bf16.xpose.msra.mxu0 0
    %207 = vmatprep.subr.bf16.mxu0 0
    %208 = vmatpush1.bf16.xpose.msra.mxu0 0
    %209 = vmatprep.subr.bf16.mxu0 0
    %210 = vmatpush1.bf16.xpose.msra.mxu0 0
    %211 = vmatprep.subr.bf16.mxu0 0
    %212 = vmatpush1.bf16.xpose.msra.mxu0 0
    %213 = vmatprep.subr.bf16.mxu0 0
    %214 = vmatpush1.bf16.xpose.msra.mxu0 0
    %215 = vmatprep.subr.bf16.mxu0 0
    %216 = vmatpush1.bf16.xpose.msra.mxu0 0
    %217 = vmatprep.subr.bf16.mxu0 0
    %218 = vmatpush1.bf16.xpose.msra.mxu0 0
    %219 = vmatprep.subr.bf16.mxu0 0
    %220 = vmatpush1.bf16.xpose.msra.mxu0 %v203
    %221 = vmatprep.subr.bf16.mxu0 0
    %222 = vmatpush2.bf16.xpose.msra.mxu0 0
    %223 = vmatprep.subr.bf16.mxu0 0
    %224 = vmatpush2.bf16.xpose.msra.mxu0 0
    %225 = vmatprep.subr.bf16.mxu0 0
    %226 = vmatpush2.bf16.xpose.msra.mxu0 0
    %227 = vmatprep.subr.bf16.mxu0 0
    %228 = vmatpush2.bf16.xpose.msra.mxu0 0
    %229 = vmatprep.subr.bf16.mxu0 0
    %230 = vmatpush2.bf16.xpose.msra.mxu0 0
    %231 = vmatprep.subr.bf16.mxu0 0
    %232 = vmatpush2.bf16.xpose.msra.mxu0 0
    %233 = vmatprep.subr.bf16.mxu0 0
    %234 = vmatpush2.bf16.xpose.msra.mxu0 0
    %235 = vmatprep.subr.bf16.mxu0 0
    %236 = vmatpush2.bf16.xpose.msra.mxu0 0
    %237 = vmatprep.mubr.bf16.mxu0 0
    %238 = vmatmul.mubr.bf16.gmra.mxu0 %v200
    %v239 = vpop.f32.mrf.mxu0
    %v240 = vadd.f32 0.0, %v239
    %v241 = vpop.f32.mrf.mxu0
    %v242 = vpop.f32.mrf.mxu0
    %v243 = vadd.f32 0.0, %v242
    %v244 = vpop.f32.mrf.mxu0
    %245 = vdwg.mxu0
    %v246 = vsel %vm194, %v240, -1e+30
    %v247 = vsel %vm195, %v243, -1e+30
    %vm248 = vcmask 130048
    %v249 = vsel %vm248, %v246, -inf
    %250 = vmax.xlane.f32.xlu0 %v249
    %v251 = vpop.xlane.xlu0 %250
    %v252 = vsel %vm248, %v247, -inf
    %253 = vmax.xlane.f32.xlu0 %v252
    %v254 = vpop.xlane.xlu0 %253
    %v255 = vsub.f32 %v246, %v251
    %v256 = vsub.f32 %v247, %v254
    %v257 = vmul.f32 %v255, 1.442695
    %v258 = vpow.pop %v257
    %v259 = vmul.f32 %v256, 1.442695
    %v260 = vpow.pop %v259
    %v261 = vsel %vm248, %v258, 0.0
    %262 = vadd.xlane.f32.xlu0 %v261
    %v263 = vpop.xlane.xlu0 %262
    %v264 = vsel %vm248, %v260, 0.0
    %265 = vadd.xlane.f32.xlu0 %v264
    %v266 = vpop.xlane.xlu0 %265
    %v267 = vrcp.pop %v263
    %v268 = vrcp.pop %v266
    %v269 = vmul.f32 %v258, %v267
    %v270 = vmul.f32 %v260, %v268
    %v271 = vpack.c.bf16 %v270, %v269
    %v273 = vsel %vm248, %v271, 0
    %275 = vmatprep.subr.bf16.mxu0 0
    %276 = vmatpush1.bf16.msra.mxu0 0
    %277 = vmatprep.subr.bf16.mxu0 0
    %278 = vmatpush1.bf16.msra.mxu0 0
    %279 = vmatprep.subr.bf16.mxu0 0
    %280 = vmatpush1.bf16.msra.mxu0 0
    %281 = vmatprep.subr.bf16.mxu0 0
    %282 = vmatpush1.bf16.msra.mxu0 0
    %283 = vmatprep.subr.bf16.mxu0 0
    %284 = vmatpush1.bf16.msra.mxu0 0
    %285 = vmatprep.subr.bf16.mxu0 0
    %286 = vmatpush1.bf16.msra.mxu0 0
    %287 = vmatprep.subr.bf16.mxu0 0
    %288 = vmatpush1.bf16.msra.mxu0 0
    %289 = vmatprep.subr.bf16.mxu0 0
    %290 = vmatpush1.bf16.msra.mxu0 %v166
    %291 = vmatprep.subr.bf16.mxu0 0
    %292 = vmatpush2.bf16.msra.mxu0 0
    %293 = vmatprep.subr.bf16.mxu0 0
    %294 = vmatpush2.bf16.msra.mxu0 0
    %295 = vmatprep.subr.bf16.mxu0 0
    %296 = vmatpush2.bf16.msra.mxu0 0
    %297 = vmatprep.subr.bf16.mxu0 0
    %298 = vmatpush2.bf16.msra.mxu0 0
    %299 = vmatprep.subr.bf16.mxu0 0
    %300 = vmatpush2.bf16.msra.mxu0 0
    %301 = vmatprep.subr.bf16.mxu0 0
    %302 = vmatpush2.bf16.msra.mxu0 0
    %303 = vmatprep.subr.bf16.mxu0 0
    %304 = vmatpush2.bf16.msra.mxu0 0
    %305 = vmatprep.subr.bf16.mxu0 0
    %306 = vmatpush2.bf16.msra.mxu0 0
    %307 = vmatprep.mubr.bf16.mxu0 0
    %308 = vmatmul.mubr.bf16.gmra.mxu0 %v273
    %v309 = vpop.f32.mrf.mxu0
    %v310 = vadd.f32 0.0, %v309
    %v311 = vpop.f32.mrf.mxu0
    %v312 = vpop.f32.mrf.mxu0
    %v313 = vadd.f32 0.0, %v312
    %v314 = vpop.f32.mrf.mxu0
    %315 = vdwg.mxu0
    %317 = vrot.lane.b32.xlu0 %v164, 96
    %v318 = vpop.permute.xlu0 %317
    %319 = vrot.lane.b32.xlu0 %v165, 32
    %v320 = vpop.permute.xlu0 %319
    %v322 = vsel %vm97, %v318, 0
    %v325 = vsel %vm97, %v320, 0
    %327 = vmatprep.subr.bf16.mxu0 0
    %328 = vmatpush1.bf16.xpose.msra.mxu0 0
    %329 = vmatprep.subr.bf16.mxu0 0
    %330 = vmatpush1.bf16.xpose.msra.mxu0 0
    %331 = vmatprep.subr.bf16.mxu0 0
    %332 = vmatpush1.bf16.xpose.msra.mxu0 0
    %333 = vmatprep.subr.bf16.mxu0 0
    %334 = vmatpush1.bf16.xpose.msra.mxu0 0
    %335 = vmatprep.subr.bf16.mxu0 0
    %336 = vmatpush1.bf16.xpose.msra.mxu0 0
    %337 = vmatprep.subr.bf16.mxu0 0
    %338 = vmatpush1.bf16.xpose.msra.mxu0 0
    %339 = vmatprep.subr.bf16.mxu0 0
    %340 = vmatpush1.bf16.xpose.msra.mxu0 0
    %341 = vmatprep.subr.bf16.mxu0 0
    %342 = vmatpush1.bf16.xpose.msra.mxu0 %v325
    %343 = vmatprep.subr.bf16.mxu0 0
    %344 = vmatpush2.bf16.xpose.msra.mxu0 0
    %345 = vmatprep.subr.bf16.mxu0 0
    %346 = vmatpush2.bf16.xpose.msra.mxu0 0
    %347 = vmatprep.subr.bf16.mxu0 0
    %348 = vmatpush2.bf16.xpose.msra.mxu0 0
    %349 = vmatprep.subr.bf16.mxu0 0
    %350 = vmatpush2.bf16.xpose.msra.mxu0 0
    %351 = vmatprep.subr.bf16.mxu0 0
    %352 = vmatpush2.bf16.xpose.msra.mxu0 0
    %353 = vmatprep.subr.bf16.mxu0 0
    %354 = vmatpush2.bf16.xpose.msra.mxu0 0
    %355 = vmatprep.subr.bf16.mxu0 0
    %356 = vmatpush2.bf16.xpose.msra.mxu0 0
    %357 = vmatprep.subr.bf16.mxu0 0
    %358 = vmatpush2.bf16.xpose.msra.mxu0 0
    %359 = vmatprep.mubr.bf16.mxu0 0
    %360 = vmatmul.mubr.bf16.gmra.mxu0 %v322
    %v361 = vpop.f32.mrf.mxu0
    %v362 = vadd.f32 0.0, %v361
    %v363 = vpop.f32.mrf.mxu0
    %v364 = vpop.f32.mrf.mxu0
    %v365 = vadd.f32 0.0, %v364
    %v366 = vpop.f32.mrf.mxu0
    %367 = vdwg.mxu0
    %v368 = vsel %vm194, %v362, -1e+30
    %v369 = vsel %vm195, %v365, -1e+30
    %v370 = vsel %vm248, %v368, -inf
    %371 = vmax.xlane.f32.xlu0 %v370
    %v372 = vpop.xlane.xlu0 %371
    %v373 = vsel %vm248, %v369, -inf
    %374 = vmax.xlane.f32.xlu0 %v373
    %v375 = vpop.xlane.xlu0 %374
    %v376 = vsub.f32 %v368, %v372
    %v377 = vsub.f32 %v369, %v375
    %v378 = vmul.f32 %v376, 1.442695
    %v379 = vpow.pop %v378
    %v380 = vmul.f32 %v377, 1.442695
    %v381 = vpow.pop %v380
    %v382 = vsel %vm248, %v379, 0.0
    %383 = vadd.xlane.f32.xlu0 %v382
    %v384 = vpop.xlane.xlu0 %383
    %v385 = vsel %vm248, %v381, 0.0
    %386 = vadd.xlane.f32.xlu0 %v385
    %v387 = vpop.xlane.xlu0 %386
    %v388 = vrcp.pop %v384
    %v389 = vrcp.pop %v387
    %v390 = vmul.f32 %v379, %v388
    %v391 = vmul.f32 %v381, %v389
    %v392 = vpack.c.bf16 %v391, %v390
    %394 = vrot.lane.b32.xlu0 %v166, 96
    %v395 = vpop.permute.xlu0 %394
    %v398 = vsel %vm248, %v392, 0
    %400 = vmatprep.subr.bf16.mxu0 0
    %401 = vmatpush1.bf16.msra.mxu0 0
    %402 = vmatprep.subr.bf16.mxu0 0
    %403 = vmatpush1.bf16.msra.mxu0 0
    %404 = vmatprep.subr.bf16.mxu0 0
    %405 = vmatpush1.bf16.msra.mxu0 0
    %406 = vmatprep.subr.bf16.mxu0 0
    %407 = vmatpush1.bf16.msra.mxu0 0
    %408 = vmatprep.subr.bf16.mxu0 0
    %409 = vmatpush1.bf16.msra.mxu0 0
    %410 = vmatprep.subr.bf16.mxu0 0
    %411 = vmatpush1.bf16.msra.mxu0 0
    %412 = vmatprep.subr.bf16.mxu0 0
    %413 = vmatpush1.bf16.msra.mxu0 0
    %414 = vmatprep.subr.bf16.mxu0 0
    %415 = vmatpush1.bf16.msra.mxu0 %v395
    %416 = vmatprep.subr.bf16.mxu0 0
    %417 = vmatpush2.bf16.msra.mxu0 0
    %418 = vmatprep.subr.bf16.mxu0 0
    %419 = vmatpush2.bf16.msra.mxu0 0
    %420 = vmatprep.subr.bf16.mxu0 0
    %421 = vmatpush2.bf16.msra.mxu0 0
    %422 = vmatprep.subr.bf16.mxu0 0
    %423 = vmatpush2.bf16.msra.mxu0 0
    %424 = vmatprep.subr.bf16.mxu0 0
    %425 = vmatpush2.bf16.msra.mxu0 0
    %426 = vmatprep.subr.bf16.mxu0 0
    %427 = vmatpush2.bf16.msra.mxu0 0
    %428 = vmatprep.subr.bf16.mxu0 0
    %429 = vmatpush2.bf16.msra.mxu0 0
    %430 = vmatprep.subr.bf16.mxu0 0
    %431 = vmatpush2.bf16.msra.mxu0 0
    %432 = vmatprep.mubr.bf16.mxu0 0
    %433 = vmatmul.mubr.bf16.gmra.mxu0 %v398
    %v434 = vpop.f32.mrf.mxu0
    %v435 = vadd.f32 0.0, %v434
    %v436 = vpop.f32.mrf.mxu0
    %v437 = vpop.f32.mrf.mxu0
    %v438 = vadd.f32 0.0, %v437
    %v439 = vpop.f32.mrf.mxu0
    %440 = vdwg.mxu0
    %443 = vrot.lane.b32.xlu0 %v435, 32
    %v444 = vpop.permute.xlu0 %443
    %445 = vrot.lane.b32.xlu0 %v438, 32
    %v446 = vpop.permute.xlu0 %445
    %v449 = vsel %vm97, %v310, %v444
    %v450 = vsel %vm97, %v313, %v446
    %v451 = vpack.c.bf16 %v450, %v449
    %v452 = vld [vmem:[%s4] sm:$0xf]
    %v453 = vld [vmem:[%s4 + $0x4] sm:$0xf]
    %v454 = vld [vmem:[%s4 + $0x8] sm:$0xf]
    %v455 = vld [vmem:[%s4 + $0xc] sm:$0xf]
    %v456 = vld [vmem:[%s4 + $0x10] sm:$0xf]
    %v457 = vld [vmem:[%s4 + $0x14] sm:$0xf]
    %v458 = vld [vmem:[%s4 + $0x18] sm:$0xf]
    %v459 = vld [vmem:[%s4 + $0x1c] sm:$0xf]
    %v460 = vld [vmem:[%s5 + $0x1] sm:$0x1]
    %v461 = vlaneseq
    %v462 = vshrl.u32 %v461, 7
    %v463 = vsub.s32 0, %v462
    %v464 = vrot.slane %v460, %v463
    %v473 = vunpack.c.l.b16 %v452
    %v474 = vunpack.c.l.b16 %v453
    %v475 = vunpack.c.l.b16 %v454
    %v476 = vunpack.c.l.b16 %v455
    %v477 = vunpack.c.l.b16 %v456
    %v478 = vunpack.c.l.b16 %v457
    %v479 = vunpack.c.l.b16 %v458
    %v480 = vunpack.c.l.b16 %v459
    %v481 = vpack.c.b16 %v474, %v473
    %v482 = vpack.c.b16 %v476, %v475
    %v483 = vpack.c.b16 %v478, %v477
    %v484 = vpack.c.b16 %v480, %v479
    %vm489 = vcmask 523264
    %v491 = vsel %vm489, %v451, 0
    %493 = vmatprep.subr.bf16.mxu0 0
    %494 = vmatpush1.bf16.msra.mxu0 0
    %495 = vmatprep.subr.bf16.mxu0 0
    %496 = vmatpush1.bf16.msra.mxu0 0
    %497 = vmatprep.subr.bf16.mxu0 0
    %498 = vmatpush1.bf16.msra.mxu0 0
    %499 = vmatprep.subr.bf16.mxu0 0
    %500 = vmatpush1.bf16.msra.mxu0 0
    %501 = vmatprep.subr.bf16.mxu0 0
    %502 = vmatpush1.bf16.msra.mxu0 %v484
    %503 = vmatprep.subr.bf16.mxu0 0
    %504 = vmatpush1.bf16.msra.mxu0 %v483
    %505 = vmatprep.subr.bf16.mxu0 0
    %506 = vmatpush1.bf16.msra.mxu0 %v482
    %507 = vmatprep.subr.bf16.mxu0 0
    %508 = vmatpush1.bf16.msra.mxu0 %v481
    %509 = vmatprep.subr.bf16.mxu0 0
    %510 = vmatpush2.bf16.msra.mxu0 0
    %511 = vmatprep.subr.bf16.mxu0 0
    %512 = vmatpush2.bf16.msra.mxu0 0
    %513 = vmatprep.subr.bf16.mxu0 0
    %514 = vmatpush2.bf16.msra.mxu0 0
    %515 = vmatprep.subr.bf16.mxu0 0
    %516 = vmatpush2.bf16.msra.mxu0 0
    %517 = vmatprep.subr.bf16.mxu0 0
    %518 = vmatpush2.bf16.msra.mxu0 0
    %519 = vmatprep.subr.bf16.mxu0 0
    %520 = vmatpush2.bf16.msra.mxu0 0
    %521 = vmatprep.subr.bf16.mxu0 0
    %522 = vmatpush2.bf16.msra.mxu0 0
    %523 = vmatprep.subr.bf16.mxu0 0
    %524 = vmatpush2.bf16.msra.mxu0 0
    %525 = vmatprep.mubr.bf16.mxu0 0
    %526 = vmatmul.mubr.bf16.gmra.mxu0 %v491
    %v527 = vpop.f32.mrf.mxu0
    %v528 = vadd.f32 %v464, %v527
    %v529 = vpop.f32.mrf.mxu0
    %v530 = vpop.f32.mrf.mxu0
    %v531 = vadd.f32 %v464, %v530
    %v532 = vpop.f32.mrf.mxu0
    %533 = vdwg.mxu0
    %v534 = vadd.f32 %v528, %v52
    %v535 = vadd.f32 %v531, %v53
    %v536 = vsel %vm97, %v534, 0.0
    %537 = vadd.xlane.f32.xlu0 %v536
    %v538 = vpop.xlane.xlu0 %537
    %v539 = vsel %vm97, %v535, 0.0
    %540 = vadd.xlane.f32.xlu0 %v539
    %v541 = vpop.xlane.xlu0 %540
    %v542 = vrcp.pop 32.0
    %v543 = vmul.f32 %v538, %v542
    %v544 = vmul.f32 %v541, %v542
    %v545 = vsub.f32 %v534, %v543
    %v546 = vsub.f32 %v535, %v544
    %v547 = vmul.f32 %v545, %v545
    %v548 = vmul.f32 %v546, %v546
    %v549 = vsel %vm97, %v547, 0.0
    %550 = vadd.xlane.f32.xlu0 %v549
    %v551 = vpop.xlane.xlu0 %550
    %v552 = vsel %vm97, %v548, 0.0
    %553 = vadd.xlane.f32.xlu0 %v552
    %v554 = vpop.xlane.xlu0 %553
    %v555 = vmul.f32 %v551, %v542
    %v556 = vmul.f32 %v554, %v542
    %v557 = vadd.f32 %v555, 1e-05
    %v558 = vadd.f32 %v556, 1e-05
    %v559 = vrsqrt.pop %v557
    %v560 = vrsqrt.pop %v558
    %v561 = vmul.f32 %v545, %v559
    %v562 = vmul.f32 %v546, %v560
    %v563 = vld [vmem:[%s5 + $0x2] sm:$0x1]
    %v564 = vlaneseq
    %v565 = vshrl.u32 %v564, 7
    %v566 = vsub.s32 0, %v565
    %v567 = vrot.slane %v563, %v566
    %v568 = vmul.f32 %v561, %v567
    %v569 = vmul.f32 %v562, %v567
    %v570 = vld [vmem:[%s5 + $0x3] sm:$0x1]
    %v571 = vlaneseq
    %v572 = vshrl.u32 %v571, 7
    %v573 = vsub.s32 0, %v572
    %v574 = vrot.slane %v570, %v573
    %v575 = vadd.f32 %v568, %v574
    %v576 = vadd.f32 %v569, %v574
    %579 = vrot.lane.b32.xlu0 %v269, 32
    %v580 = vpop.permute.xlu0 %579
    %581 = vrot.lane.b32.xlu0 %v270, 32
    %v582 = vpop.permute.xlu0 %581
    %587 = vrot.lane.b32.xlu0 %v390, 48
    %v588 = vpop.permute.xlu0 %587
    %589 = vrot.lane.b32.xlu0 %v391, 48
    %v590 = vpop.permute.xlu0 %589
    %v593 = vsel %vm97, %v575, %v580
    %v594 = vsel %vm97, %v576, %v582
    %vm595 = vcmask 392192
    %v596 = vsel %vm595, %v593, %v588
    %v597 = vsel %vm595, %v594, %v590
    %v598 = vsel %vm489, %v596, 0.0
    %v599 = vsel %vm489, %v597, 0.0
    %600 = vst [vmem:[%s6] sm:$0xff] %v598
    %601 = vst [vmem:[%s6 + $0x8] sm:$0xff] %v599
    // Predicated region
    $region34: #{mha_forward.1} parent=1 // pred_check
      _
    $region35: #{mha_forward.1} parent=1 // pred_check_branch
      %603 = sbr.rel (0) target = $region37
    $region36: #{mha_forward.1} parent=1 // pred_region
      _
    $region37: #{mha_forward.1} parent=1 // pred_fallthru
      _
    // Predicated region
    $region38: #{mha_forward.1} parent=1 // pred_check
      _
    $region39: #{mha_forward.1} parent=1 // pred_check_branch
      %605 = sbr.rel (0) target = $region41
    $region40: #{mha_forward.1} parent=1 // pred_region
      _
    $region41: #{mha_forward.1} parent=1 // pred_fallthru
      _
    %606 = vsyncpa [#allocation3], 1
    %607 = vsyncpa [#allocation5], 1

</llo_original>
